<compile_context>
chip_gen: v7x
topology: tpu7x:2x2x1
jax: 0.10.0
libtpu: 0.0.40
codegen_flags: <defaults>
</compile_context>

<pallas_src>
import functools

import jax
import jax.numpy as jnp
from jax.experimental import pallas as pl
from jax.experimental.pallas import tpu as pltpu  # noqa: F401  (TPU backend)


def model_kernel(x_ref, p_ref, out_ref, *, B0, S, D):
    """Single-step kernel (whole problem per invocation).

    x_ref   : (B0*S, D)   x1 flattened b-major: row b*S + s = x1[b, s, :]
    p_ref   : (2*D+2, D)  packed params: [w1.T ; b1 ; w2.T ; b2]
    out_ref : (S*D, B0*D) out[s*D + j, b*D + d] = torch_out[s, j, b, d]
    """
    N = B0 * S
    x = x_ref[...]                                        # (N, D)

    w1t = p_ref[0:D, :]                                   # (D, D): w1t[k, j] = w1[j, k]
    b1 = p_ref[D:D + 1, :]                                # (1, D)
    w2t = p_ref[D + 1:2 * D + 1, :]                       # (D, D)
    b2 = p_ref[2 * D + 1:2 * D + 2, :]                    # (1, D)

    # Linear1 -> Linear2 -> sigmoid over ALL (b, s) rows at once.
    # D is tiny/static, so the contractions are unrolled VPU broadcast-FMAs (no MXU).
    h = jnp.broadcast_to(b1, (N, D))
    for k in range(D):
        h = h + x[:, k:k + 1] * w1t[k:k + 1, :]
    g = jnp.broadcast_to(b2, (N, D))
    for k in range(D):
        g = g + h[:, k:k + 1] * w2t[k:k + 1, :]
    x3 = jax.nn.sigmoid(g)                                # (N, D): row b*S + s = x3[s, b, :]

    two_x = 2.0 * x                                       # (N, D): row b*S + t = 2*x1[b, t, :]

    # First-occurrence argmax over b of x3[s, b, j] (only needed when B0 > 1), computed from the
    # SAME x3 values used in the sum below.  oh[t][s, j] = 1.0 iff v4[s, j] == t.
    if B0 > 1:
        m = x3[0:S, :]
        oh = [jnp.ones((S, D), jnp.float32)] + [jnp.zeros((S, D), jnp.float32)] * (B0 - 1)
        for b in range(1, B0):
            xb = x3[b * S:(b + 1) * S, :]
            better = xb > m                               # strict '>' keeps first occurrence on ties
            m = jnp.where(better, xb, m)
            for t in range(b):
                oh[t] = jnp.where(better, 0.0, oh[t])
            oh[b] = better.astype(jnp.float32)

        eye = (jax.lax.broadcasted_iota(jnp.int32, (D, D), 0)
               == jax.lax.broadcasted_iota(jnp.int32, (D, D), 1)).astype(jnp.float32)
        row_t = jax.lax.broadcasted_iota(jnp.int32, (B0, D), 0)

        # ohT[s][j, t] = [v4[s, j] == t]  (j on sublanes, ready to gather rows of 2*x1)
        ohT = []
        for s in range(S):
            oh_s = jnp.zeros((B0, D), jnp.float32)        # oh_s[t, j] = oh[t][s, j]
            for t in range(B0):
                oh_s = jnp.where(row_t == t,
                                 jnp.broadcast_to(oh[t][s:s + 1, :], (B0, D)), oh_s)
            # Orientation flip via a tiny identity matmul (trans-B contraction).
            ohT.append(jax.lax.dot_general(eye, oh_s, (((1,), (1,)), ((), ())),
                                           preferred_element_type=jnp.float32))  # (D, B0)

    # out[s, j, b, d] = relu(x3[(j if S == D else 0), b, d] + 2 * x1[b, v4[s, j], d])
    for b in range(B0):
        if S == 1:
            term = jnp.broadcast_to(x3[b * S:b * S + 1, :], (D, D))   # x3[0, b, :]
        else:                                                          # S == D
            term = x3[b * S:(b + 1) * S, :]                            # row j = x3[j, b, :]
        cand = two_x[b * S:b * S + B0, :]                              # row t = 2 * x1[b, t, :]
        for s in range(S):
            if B0 == 1:
                gath = jnp.broadcast_to(cand, (D, D))                  # v4 == 0 everywhere
            else:
                # row j of gath = 2 * x1[b, v4[s, j], :]
                gath = jnp.dot(ohT[s], cand, preferred_element_type=jnp.float32)  # (D, D)
            out_ref[s * D:(s + 1) * D, b * D:(b + 1) * D] = jnp.maximum(term + gath, 0.0)


def model_forward(x1, w1, b1, w2, b2):
    """Pallas TPU forward of the PyTorch Model. Returns (S, D, B0, D) like torch."""
    x1 = jnp.asarray(x1, jnp.float32)
    w1 = jnp.asarray(w1, jnp.float32)
    b1 = jnp.asarray(b1, jnp.float32)
    w2 = jnp.asarray(w2, jnp.float32)
    b2 = jnp.asarray(b2, jnp.float32)
    B0, S, D = x1.shape
    # Constraints implied by the torch module's broadcast + advanced indexing.
    assert S == D or S == 1, "broadcast x3 + v5[v4] requires S == D or S == 1"
    assert B0 <= S, "gather v5[v4] requires argmax indices (< B0) valid for an axis of size S"

    x_flat = x1.reshape(B0 * S, D)                                   # free reshape (b-major rows)
    params = jnp.concatenate(
        [w1.T, b1.reshape(1, D), w2.T, b2.reshape(1, D)], axis=0)    # (2*D+2, D), single operand

    out2d = pl.pallas_call(
        functools.partial(model_kernel, B0=B0, S=S, D=D),
        out_shape=jax.ShapeDtypeStruct((S * D, B0 * D), jnp.float32),
        grid=(1,),                                                   # whole problem in one step
        in_specs=[
            pl.BlockSpec((B0 * S, D), lambda i: (0, 0)),             # x (full block)
            pl.BlockSpec((2 * D + 2, D), lambda i: (0, 0)),          # packed params (full block)
        ],
        out_specs=pl.BlockSpec((S * D, B0 * D), lambda i: (0, 0)),
    )(x_flat, params)

    # Kernel already emits torch (s, j, b, d) order; splitting axes is a free reshape.
    return out2d.reshape(S, D, B0, D)


def reference(x1, w1, b1, w2, b2):
    """Pure-JAX mirror of the PyTorch forward."""
    v1 = jnp.transpose(x1, (1, 0, 2))
    x3 = jax.nn.sigmoid((v1 @ w1.T + b1) @ w2.T + b2)
    v4 = jnp.argmax(x3, axis=1)           # (S, D)
    v5 = (2.0 * v1)[v4]                   # (S, D, B0, D)
    return jnp.maximum(x3 + v5, 0.0)


if __name__ == "__main__":
    key = jax.random.PRNGKey(0)
    kx_a, kx_b, k1w, k1b, k2w, k2b = jax.random.split(key, 6)

    D = 2  # Linear(2, 2) in the module
    bound = 1.0 / (D ** 0.5)
    w1 = jax.random.uniform(k1w, (D, D), jnp.float32, -bound, bound)
    b1 = jax.random.uniform(k1b, (D,), jnp.float32, -bound, bound)
    w2 = jax.random.uniform(k2w, (D, D), jnp.float32, -bound, bound)
    b2 = jax.random.uniform(k2b, (D,), jnp.float32, -bound, bound)

    # Spec input shape: x1 = torch.randn(1, 2, 2)
    x1_a = jax.random.normal(kx_a, (1, 2, 2), dtype=jnp.float32)
    out_a = jax.block_until_ready(model_forward(x1_a, w1, b1, w2, b2))
    ref_a = reference(x1_a, w1, b1, w2, b2)
    assert out_a.shape == ref_a.shape == (2, 2, 1, 2), (out_a.shape, ref_a.shape)
    if not jnp.allclose(out_a, ref_a, atol=1e-5, rtol=1e-5):
        raise AssertionError("Pallas kernel mismatches JAX reference for x1 shape (1, 2, 2)")

    # Extra shape exercising the non-trivial argmax / one-hot gather path (B0 = 2).
    x1_b = jax.random.normal(kx_b, (2, 2, 2), dtype=jnp.float32)
    out_b = jax.block_until_ready(model_forward(x1_b, w1, b1, w2, b2))
    ref_b = reference(x1_b, w1, b1, w2, b2)
    assert out_b.shape == ref_b.shape == (2, 2, 2, 2), (out_b.shape, ref_b.shape)
    if not jnp.allclose(out_b, ref_b, atol=1e-5, rtol=1e-5):
        raise AssertionError("Pallas kernel mismatches JAX reference for x1 shape (2, 2, 2)")

    print("KERNEL_OK")
</pallas_src>

<mosaic_0001>
module attributes {stable_mosaic.version = 11 : i64} {
  func.func @model_kernel(%arg0: i32, %arg1: memref<2x2xf32, #tpu.memory_space<vmem>>, %arg2: memref<6x2xf32, #tpu.memory_space<vmem>>, %arg3: memref<4x2xf32, #tpu.memory_space<vmem>>) attributes {dimension_semantics = [#tpu.dimension_semantics<arbitrary>], iteration_bounds = array<i64: 1>, scalar_prefetch = 0 : i64, scratch_operands = 0 : i64, tpu.core_type = #tpu.core_type<tc>, window_params = [{pipeline_mode = #tpu.pipeline_mode<synchronous>, transform_indices = @transform_0, window_bounds = array<i64: 2, 2>}, {pipeline_mode = #tpu.pipeline_mode<synchronous>, transform_indices = @transform_1, window_bounds = array<i64: 6, 2>}, {pipeline_mode = #tpu.pipeline_mode<synchronous>, transform_indices = @transform_2, window_bounds = array<i64: 4, 2>}]} {
    %c0 = arith.constant 0 : index
    %c0_0 = arith.constant 0 : index
    %0 = vector.load %arg1[%c0, %c0_0] : memref<2x2xf32, #tpu.memory_space<vmem>>, vector<2x2xf32>
    %c0_1 = arith.constant 0 : index
    %c0_2 = arith.constant 0 : index
    %1 = vector.load %arg2[%c0_1, %c0_2] : memref<6x2xf32, #tpu.memory_space<vmem>>, vector<2x2xf32>
    %c2 = arith.constant 2 : index
    %c0_3 = arith.constant 0 : index
    %2 = vector.load %arg2[%c2, %c0_3] : memref<6x2xf32, #tpu.memory_space<vmem>>, vector<1x2xf32>
    %c3 = arith.constant 3 : index
    %c0_4 = arith.constant 0 : index
    %3 = vector.load %arg2[%c3, %c0_4] : memref<6x2xf32, #tpu.memory_space<vmem>>, vector<2x2xf32>
    %c5 = arith.constant 5 : index
    %c0_5 = arith.constant 0 : index
    %4 = vector.load %arg2[%c5, %c0_5] : memref<6x2xf32, #tpu.memory_space<vmem>>, vector<1x2xf32>
    %5 = vector.shape_cast %2 : vector<1x2xf32> to vector<1x2xf32>
    %6 = vector.broadcast %5 : vector<1x2xf32> to vector<2x2xf32>
    %7 = vector.extract_strided_slice %0 {offsets = [0, 0], sizes = [2, 1], strides = [1, 1]} : vector<2x2xf32> to vector<2x1xf32>
    %8 = vector.extract_strided_slice %1 {offsets = [0, 0], sizes = [1, 2], strides = [1, 1]} : vector<2x2xf32> to vector<1x2xf32>
    %9 = vector.broadcast %7 : vector<2x1xf32> to vector<2x2xf32>
    %10 = vector.broadcast %8 : vector<1x2xf32> to vector<2x2xf32>
    %11 = arith.mulf %9, %10 : vector<2x2xf32>
    %12 = arith.addf %6, %11 : vector<2x2xf32>
    %13 = vector.extract_strided_slice %0 {offsets = [0, 1], sizes = [2, 1], strides = [1, 1]} : vector<2x2xf32> to vector<2x1xf32>
    %14 = vector.extract_strided_slice %1 {offsets = [1, 0], sizes = [1, 2], strides = [1, 1]} : vector<2x2xf32> to vector<1x2xf32>
    %15 = vector.broadcast %13 : vector<2x1xf32> to vector<2x2xf32>
    %16 = vector.broadcast %14 : vector<1x2xf32> to vector<2x2xf32>
    %17 = arith.mulf %15, %16 : vector<2x2xf32>
    %18 = arith.addf %12, %17 : vector<2x2xf32>
    %19 = vector.shape_cast %4 : vector<1x2xf32> to vector<1x2xf32>
    %20 = vector.broadcast %19 : vector<1x2xf32> to vector<2x2xf32>
    %21 = vector.extract_strided_slice %18 {offsets = [0, 0], sizes = [2, 1], strides = [1, 1]} : vector<2x2xf32> to vector<2x1xf32>
    %22 = vector.extract_strided_slice %3 {offsets = [0, 0], sizes = [1, 2], strides = [1, 1]} : vector<2x2xf32> to vector<1x2xf32>
    %23 = vector.broadcast %21 : vector<2x1xf32> to vector<2x2xf32>
    %24 = vector.broadcast %22 : vector<1x2xf32> to vector<2x2xf32>
    %25 = arith.mulf %23, %24 : vector<2x2xf32>
    %26 = arith.addf %20, %25 : vector<2x2xf32>
    %27 = vector.extract_strided_slice %18 {offsets = [0, 1], sizes = [2, 1], strides = [1, 1]} : vector<2x2xf32> to vector<2x1xf32>
    %28 = vector.extract_strided_slice %3 {offsets = [1, 0], sizes = [1, 2], strides = [1, 1]} : vector<2x2xf32> to vector<1x2xf32>
    %29 = vector.broadcast %27 : vector<2x1xf32> to vector<2x2xf32>
    %30 = vector.broadcast %28 : vector<1x2xf32> to vector<2x2xf32>
    %31 = arith.mulf %29, %30 : vector<2x2xf32>
    %32 = arith.addf %26, %31 : vector<2x2xf32>
    %33 = arith.negf %32 : vector<2x2xf32>
    %34 = math.exp %33 : vector<2x2xf32>
    %cst = arith.constant 1.000000e+00 : f32
    %35 = vector.broadcast %cst : f32 to vector<2x2xf32>
    %36 = arith.addf %35, %34 : vector<2x2xf32>
    %37 = arith.divf %35, %36 : vector<2x2xf32>
    %cst_6 = arith.constant 2.000000e+00 : f32
    %38 = vector.broadcast %cst_6 : f32 to vector<2x2xf32>
    %39 = arith.mulf %38, %0 : vector<2x2xf32>
    %40 = vector.extract_strided_slice %39 {offsets = [0, 0], sizes = [1, 2], strides = [1, 1]} : vector<2x2xf32> to vector<1x2xf32>
    %41 = vector.shape_cast %40 : vector<1x2xf32> to vector<1x2xf32>
    %42 = vector.broadcast %41 : vector<1x2xf32> to vector<2x2xf32>
    %43 = arith.addf %37, %42 : vector<2x2xf32>
    %cst_7 = arith.constant 0.000000e+00 : f32
    %44 = vector.broadcast %cst_7 : f32 to vector<2x2xf32>
    %45 = arith.maximumf %43, %44 : vector<2x2xf32>
    %c0_8 = arith.constant 0 : index
    %c0_9 = arith.constant 0 : index
    %46 = vector.load %arg3[%c0_8, %c0_9] : memref<4x2xf32, #tpu.memory_space<vmem>>, vector<2x2xf32>
    tpu.vector_store %arg3[%c0_8, %c0_9], %45 {strides = array<i32>} : memref<4x2xf32, #tpu.memory_space<vmem>>, vector<2x2xf32>,
    %47 = vector.shape_cast %40 : vector<1x2xf32> to vector<1x2xf32>
    %48 = vector.broadcast %47 : vector<1x2xf32> to vector<2x2xf32>
    %49 = arith.addf %37, %48 : vector<2x2xf32>
    %cst_10 = arith.constant 0.000000e+00 : f32
    %50 = vector.broadcast %cst_10 : f32 to vector<2x2xf32>
    %51 = arith.maximumf %49, %50 : vector<2x2xf32>
    %c2_11 = arith.constant 2 : index
    %c0_12 = arith.constant 0 : index
    %52 = vector.load %arg3[%c2_11, %c0_12] : memref<4x2xf32, #tpu.memory_space<vmem>>, vector<2x2xf32>
    tpu.vector_store %arg3[%c2_11, %c0_12], %51 {strides = array<i32>} : memref<4x2xf32, #tpu.memory_space<vmem>>, vector<2x2xf32>,
    return
  }
  func.func @transform_0(%arg0: i32) -> (i32, i32) {
    %c0_i32 = arith.constant 0 : i32
    %c0_i32_0 = arith.constant 0 : i32
    %c0_i32_1 = arith.constant 0 : i32
    return %c0_i32, %c0_i32_0 : i32, i32
  }
  func.func @transform_1(%arg0: i32) -> (i32, i32) {
    %c0_i32 = arith.constant 0 : i32
    %c0_i32_0 = arith.constant 0 : i32
    %c0_i32_1 = arith.constant 0 : i32
    return %c0_i32, %c0_i32_0 : i32, i32
  }
  func.func @transform_2(%arg0: i32) -> (i32, i32) {
    %c0_i32 = arith.constant 0 : i32
    %c0_i32_0 = arith.constant 0 : i32
    %c0_i32_1 = arith.constant 0 : i32
    return %c0_i32, %c0_i32_0 : i32, i32
  }
}

</mosaic_0001>

<llo_original>
// kernel: tpu_custom_call.1
$region0: #{tpu_custom_call.1}
  #allocation0 [shape = 'u32[]', space=smem, size = 0x4, offset = 0x4, fixed_abs, tag = 'smem constant byte address 0x4 - core index']
  #allocation1 [shape = 'u32[144,128]{1,0:T(1,128)}', space=vmem, size = 0x12000, scoped, tag = 'internal scratch']
  %s0 = inlined_call_operand.vmem [shape: f32[2,2], index: 0, kind: input, shape index: {}]
  %s1 = inlined_call_operand.vmem [shape: f32[6,2], index: 1, kind: input, shape index: {}]
  %s2 = inlined_call_operand.vmem [shape: f32[4,2], index: 2, kind: output, shape index: {}]
  %s3 = sld [smem:[#allocation0]]
  $region18: #{tpu_custom_call.1} parent=0
    _
  %s5 = ssub.s32 1, %s3
  %s6 = scalar_select 0, %s5, %s3
  // Predicated region
  $region2: #{tpu_custom_call.1} parent=0 // pred_check
    _
  $region3: #{tpu_custom_call.1} parent=0 // pred_check_branch
    %8 = sbr.rel (0) target = $region5
  $region4: #{tpu_custom_call.1} parent=0 // pred_region
    _
  $region5: #{tpu_custom_call.1} parent=0 // pred_fallthru
    _
  // Predicated region
  $region6: #{tpu_custom_call.1} parent=0 // pred_check
    _
  $region7: #{tpu_custom_call.1} parent=0 // pred_check_branch
    %10 = sbr.rel (0) target = $region9
  $region8: #{tpu_custom_call.1} parent=0 // pred_region
    _
  $region9: #{tpu_custom_call.1} parent=0 // pred_fallthru
    _
  %v11 = vld [vmem:[%s0] sm:$0x3]
  %v12 = vld [vmem:[%s1] sm:$0x3]
  %v13 = vld [vmem:[%s1 + $0x2] sm:$0x1]
  %v14 = vld [vmem:[%s1 + $0x3] sm:$0x3]
  %v15 = vld [vmem:[%s1 + $0x5] sm:$0x1]
  %v16 = vlaneseq
  %v17 = vshrl.u32 %v16, 7
  %v18 = vsub.s32 0, %v17
  %v19 = vrot.slane %v13, %v18
  %21 = vset.pattern.permute.xlu0 0
  %22 = vperm.xlu0 %21, %v11
  %v23 = vpop.permute.xlu0 %22
  %v25 = vlaneseq
  %v26 = vshrl.u32 %v25, 7
  %v27 = vsub.s32 0, %v26
  %v28 = vrot.slane %v12, %v27
  %v29 = vmul.f32 %v23, %v28
  %v30 = vadd.f32 %v19, %v29
  %31 = vset.pattern.permute.xlu0 1
  %32 = vperm.xlu0 %31, %v11
  %v33 = vpop.permute.xlu0 %32
  %v35 = vlaneseq
  %v36 = vshrl.u32 %v35, 7
  %v37 = vsub.s32 1, %v36
  %v38 = vrot.slane %v12, %v37
  %v39 = vmul.f32 %v33, %v38
  %v40 = vadd.f32 %v30, %v39
  %v41 = vlaneseq
  %v42 = vshrl.u32 %v41, 7
  %v43 = vsub.s32 0, %v42
  %v44 = vrot.slane %v15, %v43
  %46 = vset.pattern.permute.xlu0 0
  %47 = vperm.xlu0 %46, %v40
  %v48 = vpop.permute.xlu0 %47
  %v50 = vlaneseq
  %v51 = vshrl.u32 %v50, 7
  %v52 = vsub.s32 0, %v51
  %v53 = vrot.slane %v14, %v52
  %v54 = vmul.f32 %v48, %v53
  %v55 = vadd.f32 %v44, %v54
  %56 = vset.pattern.permute.xlu0 1
  %57 = vperm.xlu0 %56, %v40
  %v58 = vpop.permute.xlu0 %57
  %v60 = vlaneseq
  %v61 = vshrl.u32 %v60, 7
  %v62 = vsub.s32 1, %v61
  %v63 = vrot.slane %v14, %v62
  %v64 = vmul.f32 %v58, %v63
  %v65 = vadd.f32 %v55, %v64
  %v66 = vxor.u32 %v65, 2147483648
  %v67 = vmul.f32 %v66, 1.442695
  %v68 = vpow.pop %v67
  %v69 = vadd.f32 %v68, 1.0
  %v70 = vrcp.pop %v69
  %v71 = vmul.f32 1.0, %v70
  %v72 = vmul.f32 %v11, 2.0
  %v73 = vlaneseq
  %v74 = vshrl.u32 %v73, 7
  %v75 = vsub.s32 0, %v74
  %v76 = vrot.slane %v72, %v75
  %v77 = vadd.f32 %v71, %v76
  %v78 = vmax.f32 %v77, 0.0
  %vm79 = vcmask 9216
  %80 = vst.msk [vmem:[%s2] sm:$0x3] %vm79, %v78
  %81 = vst.msk [vmem:[%s2 + $0x2] sm:$0x3] %vm79, %v78
  // Predicated region
  $region10: #{tpu_custom_call.1} parent=0 // pred_check
    _
  $region11: #{tpu_custom_call.1} parent=0 // pred_check_branch
    %83 = sbr.rel (0) target = $region13
  $region12: #{tpu_custom_call.1} parent=0 // pred_region
    _
  $region13: #{tpu_custom_call.1} parent=0 // pred_fallthru
    _
  // Predicated region
  $region14: #{tpu_custom_call.1} parent=0 // pred_check
    _
  $region15: #{tpu_custom_call.1} parent=0 // pred_check_branch
    %85 = sbr.rel (0) target = $region17
  $region16: #{tpu_custom_call.1} parent=0 // pred_region
    _
  $region17: #{tpu_custom_call.1} parent=0 // pred_fallthru
    _

</llo_original>
